<compile_context>
chip_gen: v7x
topology: tpu7x:2x2x1
jax: 0.10.0
libtpu: 0.0.40
codegen_flags: <defaults>
</compile_context>

<pallas_src>
import functools

import jax
import jax.numpy as jnp
import numpy as np
from jax.experimental import pallas as pl
from jax.experimental.pallas import tpu as pltpu


N_CLASSES = 2
N_OUT_PADDED = 8  # small zero-padding of the h2o layer (epilogue stays narrow)


def _round_up(a, m):
    return ((a + m - 1) // m) * m


def _embedded_nn_kernel(x_ref, wbig_ref, bbig_ref, w2_ref, b2_ref,
                        w3_ref, b3_ref, out_ref):
    cdt = wbig_ref.dtype                                             # compute dtype (bf16)
    x = x_ref[...].astype(cdt)                                       # (TB, IN)

    # embed (block-diagonal over the 10 chunks) + relu  [dropout = identity]
    h1 = jnp.dot(x, wbig_ref[...], preferred_element_type=jnp.float32)
    h1 = jnp.maximum(h1 + bbig_ref[...], 0.0)                        # (TB, 10E) f32

    # e2h + relu  [dropout = identity]
    h2 = jnp.dot(h1.astype(cdt), w2_ref[...],
                 preferred_element_type=jnp.float32)
    h2 = jnp.maximum(h2 + b2_ref[...], 0.0)                          # (TB, H) f32

    # h2o (output dim padded only to N_OUT_PADDED columns)
    logits = jnp.dot(h2.astype(cdt), w3_ref[...],
                     preferred_element_type=jnp.float32)
    logits = logits + b3_ref[...]                                    # (TB, 8) f32

    # 2-class log-softmax over dim=1, elementwise (VPU/EUP; no cross-lane reduce).
    l0 = logits[:, 0:1]
    l1 = logits[:, 1:2]
    m = jnp.maximum(l0, l1)
    lse = m + jnp.log(jnp.exp(l0 - m) + jnp.exp(l1 - m))             # (TB, 1)

    # Store only the two real classes -> (TB, 2) output, no junk columns.
    out_ref[...] = logits[:, :N_CLASSES] - lse


def pack_embedded_nn_params(w_embed, b_embed, w_e2h, b_e2h, w_h2o, b_h2o,
                            compute_dtype=jnp.bfloat16):
    """One-time parameter glue (call once, outside the per-step forward).

    PyTorch Linear layout (out, in) -> pre-transposed (in, out); the 10 shared
    per-chunk embed Linears are folded into one block-diagonal weight; the h2o
    layer is zero-padded to N_OUT_PADDED output columns. Matmul weights are
    cast to `compute_dtype` (bf16); biases stay f32.
    """
    w_embed = np.asarray(w_embed, np.float32)
    b_embed = np.asarray(b_embed, np.float32)
    w_e2h = np.asarray(w_e2h, np.float32)
    b_e2h = np.asarray(b_e2h, np.float32)
    w_h2o = np.asarray(w_h2o, np.float32)
    b_h2o = np.asarray(b_h2o, np.float32)

    E, chunk = w_embed.shape
    H = w_e2h.shape[0]
    in_size = 10 * chunk

    we_t = w_embed.T                                                 # (chunk, E)
    wbig = np.zeros((in_size, 10 * E), np.float32)
    for i in range(10):
        wbig[i * chunk:(i + 1) * chunk, i * E:(i + 1) * E] = we_t
    bbig = np.tile(b_embed, 10).reshape(1, 10 * E)

    w2 = w_e2h.T                                                     # (10E, H)
    b2 = b_e2h.reshape(1, H)

    w3 = np.zeros((H, N_OUT_PADDED), np.float32)
    w3[:, :N_CLASSES] = w_h2o.T
    b3 = np.zeros((1, N_OUT_PADDED), np.float32)
    b3[0, :N_CLASSES] = b_h2o

    return (jnp.asarray(wbig, compute_dtype),
            jnp.asarray(bbig, jnp.float32),
            jnp.asarray(w2, compute_dtype),
            jnp.asarray(b2, jnp.float32),
            jnp.asarray(w3, compute_dtype),
            jnp.asarray(b3, jnp.float32))


@functools.partial(jax.jit, static_argnames=("tile_b",))
def embedded_nn_forward(x, packed_params, tile_b=4096):
    """x: (B, input_size) float32 or bfloat16. Returns (B, 2) log-probs (f32)."""
    wbig, bbig, w2, b2, w3, b3 = packed_params
    B, in_size = x.shape

    # --- choose batch tile (static, shapes known at trace time) -------------
    # Target >= 4 grid steps when the batch allows (>= 2 per TensorCore on
    # v7x megacore, and >= 3-4 steps to hide first/last DMA on v5e/v6e).
    b8 = _round_up(B, 8)
    tb = min(tile_b, b8)
    if b8 >= 64:
        tb = min(tb, _round_up(-(-b8 // 4), 8))
    elif b8 >= 16:
        tb = min(tb, _round_up(-(-b8 // 2), 8))

    # --- pad batch so no remainder rows are dropped --------------------------
    b_padded = _round_up(B, tb)
    if b_padded != B:
        x = jnp.pad(x, ((0, b_padded - B), (0, 0)))
    grid = (b_padded // tb,)

    out = pl.pallas_call(
        _embedded_nn_kernel,
        out_shape=jax.ShapeDtypeStruct((b_padded, N_CLASSES), jnp.float32),
        grid_spec=pltpu.PrefetchScalarGridSpec(
            num_scalar_prefetch=0,
            grid=grid,
            in_specs=[
                pl.BlockSpec((tb, in_size), lambda i: (i, 0)),       # x (batch-tiled)
                pl.BlockSpec(wbig.shape, lambda i: (0, 0)),          # block-diag embed W
                pl.BlockSpec(bbig.shape, lambda i: (0, 0)),          # embed bias (x10)
                pl.BlockSpec(w2.shape, lambda i: (0, 0)),            # e2h W
                pl.BlockSpec(b2.shape, lambda i: (0, 0)),            # e2h bias
                pl.BlockSpec(w3.shape, lambda i: (0, 0)),            # h2o W (padded to 8)
                pl.BlockSpec(b3.shape, lambda i: (0, 0)),            # h2o bias (padded)
            ],
            # (tb, 2) block: last block dim == full array dim, so the
            # (8, 128) divisibility rule is satisfied; HBM block is contiguous.
            out_specs=pl.BlockSpec((tb, N_CLASSES), lambda i: (i, 0)),
        ),
        compiler_params=pltpu.CompilerParams(
            dimension_semantics=("parallel",),
            # 48 MiB: safe on v7x (64 MiB physical VMEM per TC) while still
            # generous for big batch tiles on v5e/v6e (128 MiB physical).
            vmem_limit_bytes=48 * 1024 * 1024),
    )(x, wbig, bbig, w2, b2, w3, b3)

    return out[:B]


def _reference_forward(x, w_embed, b_embed, w_e2h, b_e2h, w_h2o, b_h2o):
    """Plain-JAX f32 reference mirroring the PyTorch forward (eval mode)."""
    B, in_size = x.shape
    chunk = in_size // 10
    hiddens = []
    for i in range(10):
        inp = x[:, i * chunk:(i + 1) * chunk]
        hiddens.append(jax.nn.relu(inp @ w_embed.T + b_embed))
    combined = jnp.concatenate(hiddens, axis=1)
    hidden = jax.nn.relu(combined @ w_e2h.T + b_e2h)
    out = hidden @ w_h2o.T + b_h2o
    return jax.nn.log_softmax(out, axis=1)


if __name__ == "__main__":
    # Small shapes consistent with the module: input_size must be divisible by 10.
    B = 20                    # deliberately not a multiple of the tile -> exercises padding
    INPUT_SIZE = 40           # -> chunk size 4
    EMBEDDING_SIZE = 8        # -> concat size 80
    HIDDEN_SIZE = 32
    # dropout p is irrelevant at inference (identity)

    key = jax.random.PRNGKey(0)
    kx, k1, k2, k3, k4, k5, k6 = jax.random.split(key, 7)

    x = jax.random.normal(kx, (B, INPUT_SIZE), dtype=jnp.float32)

    chunk = INPUT_SIZE // 10
    w_embed = jax.random.normal(k1, (EMBEDDING_SIZE, chunk), jnp.float32) * 0.1
    b_embed = jax.random.normal(k2, (EMBEDDING_SIZE,), jnp.float32) * 0.1
    w_e2h = jax.random.normal(k3, (HIDDEN_SIZE, 10 * EMBEDDING_SIZE), jnp.float32) * 0.1
    b_e2h = jax.random.normal(k4, (HIDDEN_SIZE,), jnp.float32) * 0.1
    w_h2o = jax.random.normal(k5, (2, HIDDEN_SIZE), jnp.float32) * 0.1
    b_h2o = jax.random.normal(k6, (2,), jnp.float32) * 0.1

    # One-time parameter packing (off the hot path).
    packed = pack_embedded_nn_params(w_embed, b_embed, w_e2h, b_e2h,
                                     w_h2o, b_h2o)

    out = embedded_nn_forward(x, packed)
    out = jax.block_until_ready(out)

    ref = _reference_forward(x, w_embed, b_embed, w_e2h, b_e2h, w_h2o, b_h2o)
    assert out.shape == (B, 2)
    # bf16 matmuls (f32 accumulation) vs f32 reference -> loosened tolerance.
    assert np.allclose(np.asarray(out), np.asarray(ref), atol=2e-2, rtol=2e-2)

    print("KERNEL_OK")
</pallas_src>

<mosaic_0001>
module attributes {stable_mosaic.version = 11 : i64} {
  func.func @_embedded_nn_kernel(%arg0: i32, %arg1: memref<16x40xf32, #tpu.memory_space<vmem>>, %arg2: memref<40x80xbf16, #tpu.memory_space<vmem>>, %arg3: memref<1x80xf32, #tpu.memory_space<vmem>>, %arg4: memref<80x32xbf16, #tpu.memory_space<vmem>>, %arg5: memref<1x32xf32, #tpu.memory_space<vmem>>, %arg6: memref<32x8xbf16, #tpu.memory_space<vmem>>, %arg7: memref<1x8xf32, #tpu.memory_space<vmem>>, %arg8: memref<16x2xf32, #tpu.memory_space<vmem>>) attributes {dimension_semantics = [#tpu.dimension_semantics<parallel>], iteration_bounds = array<i64: 2>, scalar_prefetch = 0 : i64, scratch_operands = 0 : i64, tpu.core_type = #tpu.core_type<tc>, window_params = [{transform_indices = @transform_0, window_bounds = array<i64: 16, 40>}, {pipeline_mode = #tpu.pipeline_mode<synchronous>, transform_indices = @transform_1, window_bounds = array<i64: 40, 80>}, {pipeline_mode = #tpu.pipeline_mode<synchronous>, transform_indices = @transform_2, window_bounds = array<i64: 1, 80>}, {pipeline_mode = #tpu.pipeline_mode<synchronous>, transform_indices = @transform_3, window_bounds = array<i64: 80, 32>}, {pipeline_mode = #tpu.pipeline_mode<synchronous>, transform_indices = @transform_4, window_bounds = array<i64: 1, 32>}, {pipeline_mode = #tpu.pipeline_mode<synchronous>, transform_indices = @transform_5, window_bounds = array<i64: 32, 8>}, {pipeline_mode = #tpu.pipeline_mode<synchronous>, transform_indices = @transform_6, window_bounds = array<i64: 1, 8>}, {transform_indices = @transform_7, window_bounds = array<i64: 16, 2>}]} {
    %c0 = arith.constant 0 : index
    %c0_0 = arith.constant 0 : index
    %0 = vector.load %arg1[%c0, %c0_0] : memref<16x40xf32, #tpu.memory_space<vmem>>, vector<16x40xf32>
    %1 = arith.truncf %0 : vector<16x40xf32> to vector<16x40xbf16>
    %c0_1 = arith.constant 0 : index
    %c0_2 = arith.constant 0 : index
    %2 = vector.load %arg2[%c0_1, %c0_2] : memref<40x80xbf16, #tpu.memory_space<vmem>>, vector<40x80xbf16>
    %cst = arith.constant dense<0.000000e+00> : vector<16x80xf32>
    %3 = tpu.matmul %1, %2, %cst {dimension_numbers = #tpu.dot_dimension_numbers<[1], [0], [0], [1], [0, 0, 1, 1], [], []>} : vector<16x40xbf16>, vector<40x80xbf16>, vector<16x80xf32> -> vector<16x80xf32>
    %c0_3 = arith.constant 0 : index
    %c0_4 = arith.constant 0 : index
    %4 = vector.load %arg3[%c0_3, %c0_4] : memref<1x80xf32, #tpu.memory_space<vmem>>, vector<1x80xf32>
    %5 = vector.broadcast %4 : vector<1x80xf32> to vector<16x80xf32>
    %6 = arith.addf %3, %5 : vector<16x80xf32>
    %cst_5 = arith.constant 0.000000e+00 : f32
    %7 = vector.broadcast %cst_5 : f32 to vector<16x80xf32>
    %8 = arith.maximumf %6, %7 : vector<16x80xf32>
    %9 = arith.truncf %8 : vector<16x80xf32> to vector<16x80xbf16>
    %c0_6 = arith.constant 0 : index
    %c0_7 = arith.constant 0 : index
    %10 = vector.load %arg4[%c0_6, %c0_7] : memref<80x32xbf16, #tpu.memory_space<vmem>>, vector<80x32xbf16>
    %cst_8 = arith.constant dense<0.000000e+00> : vector<16x32xf32>
    %11 = tpu.matmul %9, %10, %cst_8 {dimension_numbers = #tpu.dot_dimension_numbers<[1], [0], [0], [1], [0, 0, 1, 1], [], []>} : vector<16x80xbf16>, vector<80x32xbf16>, vector<16x32xf32> -> vector<16x32xf32>
    %c0_9 = arith.constant 0 : index
    %c0_10 = arith.constant 0 : index
    %12 = vector.load %arg5[%c0_9, %c0_10] : memref<1x32xf32, #tpu.memory_space<vmem>>, vector<1x32xf32>
    %13 = vector.broadcast %12 : vector<1x32xf32> to vector<16x32xf32>
    %14 = arith.addf %11, %13 : vector<16x32xf32>
    %cst_11 = arith.constant 0.000000e+00 : f32
    %15 = vector.broadcast %cst_11 : f32 to vector<16x32xf32>
    %16 = arith.maximumf %14, %15 : vector<16x32xf32>
    %17 = arith.truncf %16 : vector<16x32xf32> to vector<16x32xbf16>
    %c0_12 = arith.constant 0 : index
    %c0_13 = arith.constant 0 : index
    %18 = vector.load %arg6[%c0_12, %c0_13] : memref<32x8xbf16, #tpu.memory_space<vmem>>, vector<32x8xbf16>
    %cst_14 = arith.constant dense<0.000000e+00> : vector<16x8xf32>
    %19 = tpu.matmul %17, %18, %cst_14 {dimension_numbers = #tpu.dot_dimension_numbers<[1], [0], [0], [1], [0, 0, 1, 1], [], []>} : vector<16x32xbf16>, vector<32x8xbf16>, vector<16x8xf32> -> vector<16x8xf32>
    %c0_15 = arith.constant 0 : index
    %c0_16 = arith.constant 0 : index
    %20 = vector.load %arg7[%c0_15, %c0_16] : memref<1x8xf32, #tpu.memory_space<vmem>>, vector<1x8xf32>
    %21 = vector.broadcast %20 : vector<1x8xf32> to vector<16x8xf32>
    %22 = arith.addf %19, %21 : vector<16x8xf32>
    %23 = vector.extract_strided_slice %22 {offsets = [0, 0], sizes = [16, 1], strides = [1, 1]} : vector<16x8xf32> to vector<16x1xf32>
    %24 = vector.extract_strided_slice %22 {offsets = [0, 1], sizes = [16, 1], strides = [1, 1]} : vector<16x8xf32> to vector<16x1xf32>
    %25 = arith.maximumf %23, %24 : vector<16x1xf32>
    %26 = arith.subf %23, %25 : vector<16x1xf32>
    %27 = math.exp %26 : vector<16x1xf32>
    %28 = arith.subf %24, %25 : vector<16x1xf32>
    %29 = math.exp %28 : vector<16x1xf32>
    %30 = arith.addf %27, %29 : vector<16x1xf32>
    %31 = math.log %30 : vector<16x1xf32>
    %32 = arith.addf %25, %31 : vector<16x1xf32>
    %33 = vector.extract_strided_slice %22 {offsets = [0, 0], sizes = [16, 2], strides = [1, 1]} : vector<16x8xf32> to vector<16x2xf32>
    %34 = vector.broadcast %32 : vector<16x1xf32> to vector<16x2xf32>
    %35 = arith.subf %33, %34 : vector<16x2xf32>
    %c0_17 = arith.constant 0 : index
    %c0_18 = arith.constant 0 : index
    %36 = vector.load %arg8[%c0_17, %c0_18] : memref<16x2xf32, #tpu.memory_space<vmem>>, vector<16x2xf32>
    tpu.vector_store %arg8[%c0_17, %c0_18], %35 {strides = array<i32>} : memref<16x2xf32, #tpu.memory_space<vmem>>, vector<16x2xf32>,
    return
  }
  func.func @transform_0(%arg0: i32) -> (i32, i32) {
    %c0_i32 = arith.constant 0 : i32
    %c0_i32_0 = arith.constant 0 : i32
    return %arg0, %c0_i32 : i32, i32
  }
  func.func @transform_1(%arg0: i32) -> (i32, i32) {
    %c0_i32 = arith.constant 0 : i32
    %c0_i32_0 = arith.constant 0 : i32
    %c0_i32_1 = arith.constant 0 : i32
    return %c0_i32, %c0_i32_0 : i32, i32
  }
  func.func @transform_2(%arg0: i32) -> (i32, i32) {
    %c0_i32 = arith.constant 0 : i32
    %c0_i32_0 = arith.constant 0 : i32
    %c0_i32_1 = arith.constant 0 : i32
    return %c0_i32, %c0_i32_0 : i32, i32
  }
  func.func @transform_3(%arg0: i32) -> (i32, i32) {
    %c0_i32 = arith.constant 0 : i32
    %c0_i32_0 = arith.constant 0 : i32
    %c0_i32_1 = arith.constant 0 : i32
    return %c0_i32, %c0_i32_0 : i32, i32
  }
  func.func @transform_4(%arg0: i32) -> (i32, i32) {
    %c0_i32 = arith.constant 0 : i32
    %c0_i32_0 = arith.constant 0 : i32
    %c0_i32_1 = arith.constant 0 : i32
    return %c0_i32, %c0_i32_0 : i32, i32
  }
  func.func @transform_5(%arg0: i32) -> (i32, i32) {
    %c0_i32 = arith.constant 0 : i32
    %c0_i32_0 = arith.constant 0 : i32
    %c0_i32_1 = arith.constant 0 : i32
    return %c0_i32, %c0_i32_0 : i32, i32
  }
  func.func @transform_6(%arg0: i32) -> (i32, i32) {
    %c0_i32 = arith.constant 0 : i32
    %c0_i32_0 = arith.constant 0 : i32
    %c0_i32_1 = arith.constant 0 : i32
    return %c0_i32, %c0_i32_0 : i32, i32
  }
  func.func @transform_7(%arg0: i32) -> (i32, i32) {
    %c0_i32 = arith.constant 0 : i32
    %c0_i32_0 = arith.constant 0 : i32
    return %arg0, %c0_i32 : i32, i32
  }
}

</mosaic_0001>

<llo_original>
// kernel: embedded_nn_forward.1
$region0: #{embedded_nn_forward.1}
  #allocation0 [shape = 'u32[]', space=smem, size = 0x4, offset = 0x4, fixed_abs, tag = 'smem constant byte address 0x4 - core index']
  #allocation1 [shape = 'u32[144,128]{1,0:T(1,128)}', space=vmem, size = 0x12000, scoped, tag = 'internal scratch']
  %s0 = inlined_call_operand.vmem [shape: f32[32,40], index: 0, kind: input, shape index: {}]
  %s1 = inlined_call_operand.vmem [shape: bf16[40,80], index: 1, kind: input, shape index: {}]
  %s2 = inlined_call_operand.vmem [shape: f32[1,80], index: 2, kind: input, shape index: {}]
  %s3 = inlined_call_operand.vmem [shape: bf16[80,32], index: 3, kind: input, shape index: {}]
  %s4 = inlined_call_operand.vmem [shape: f32[1,32], index: 4, kind: input, shape index: {}]
  %s5 = inlined_call_operand.vmem [shape: bf16[32,8], index: 5, kind: input, shape index: {}]
  %s6 = inlined_call_operand.vmem [shape: f32[1,8], index: 6, kind: input, shape index: {}]
  %s7 = inlined_call_operand.vmem [shape: f32[32,2], index: 7, kind: output, shape index: {}]
  %s8 = sld [smem:[#allocation0]]
  $region61: #{embedded_nn_forward.1} parent=0
    _
  %s10 = ssub.s32 1, %s8
  %s11 = scalar_select 0, %s10, %s8
  loop: start=0, step=1, limit=4
  $region2: #{embedded_nn_forward.1} parent=0 // loop_pre_header
    _
  $region3: #{embedded_nn_forward.1} parent=0 // loop_header
    %s13 = sphi 0, %s17
    %p14 = scmp.ge.s32.totalorder %s13, 4
    %s23 = sphi 0, %s25
    %s26 = sphi 0, %s23
    %s27 = sphi 0, %s26
    %s43 = sphi 0, %s27
    %s47 = sphi 0, %s47
    %s49 = sphi 0, %s47
    %s50 = sphi 0, %s49
    %s64 = sphi 0, %s50
    %s68 = sphi 0, %s68
    %s70 = sphi 0, %s68
    %s71 = sphi 0, %s70
    %s85 = sphi 0, %s71
    %s89 = sphi 0, %s89
    %s91 = sphi 0, %s89
    %s92 = sphi 0, %s91
    %s106 = sphi 0, %s92
    %s110 = sphi 0, %s110
    %s112 = sphi 0, %s110
    %s113 = sphi 0, %s112
    %s127 = sphi 0, %s113
    %s131 = sphi 0, %s131
    %s133 = sphi 0, %s131
    %s134 = sphi 0, %s133
    %s148 = sphi 0, %s134
    %s152 = sphi 0, %s152
    %s154 = sphi 0, %s152
    %s155 = sphi 0, %s154
    %s169 = sphi 0, %s155
    %s175 = sphi 0, %s177
    %s178 = sphi 0, %s175
    %s179 = sphi 0, %s178
    %s195 = sphi 0, %s179
  $region4: #{embedded_nn_forward.1} parent=0 // loop_header_branch
    %16 = sbr.rel (%p14) target = $region8
  $region5: #{embedded_nn_forward.1} parent=0 // loop_body
    %s18 = ssub.s32 %s13, 1
    %s19 = ssub.s32 %s13, 2
    %s20 = sadd.s32 %s13, 1
    %s21 = ssub.s32 %s13, %s20
    %p22 = scmp.eq.s32.totalorder %s21, 0
    %s24 = sadd.s32 %s23, 1
    %s25 = scalar_select %p22, %s23, %s24
    %p28 = pneg %p22
    %p29 = scmp.eq.s32.totalorder %s13, 1
    %p30 = por %p28, %p29
    %p31 = scmp.ne.s32.totalorder %s23, %s26
    %p32 = scmp.eq.s32.totalorder %s13, 0
    %p33 = por %p31, %p32
    %p34 = scmp.ne.s32.totalorder %s23, %s26
    %p35 = scmp.eq.s32.totalorder %s18, 1
    %p36 = por %p34, %p35
    %p37 = scmp.ne.s32.totalorder %s26, %s27
    %p38 = scmp.eq.s32.totalorder %s18, 0
    %p39 = por %p37, %p38
    %p40 = scmp.ne.s32.totalorder %s26, %s27
    %p41 = scmp.eq.s32.totalorder %s19, 1
    %p42 = por %p40, %p41
    %p44 = scmp.ne.s32.totalorder %s27, %s43
    %p45 = scmp.eq.s32.totalorder %s19, 0
    %p46 = por %p44, %p45
    %s48 = sadd.s32 %s47, 1
    %p51 = scmp.eq.s32.totalorder %s13, 1
    %p52 = scmp.ne.s32.totalorder %s47, %s49
    %p53 = scmp.eq.s32.totalorder %s13, 0
    %p54 = por %p52, %p53
    %p55 = scmp.ne.s32.totalorder %s47, %s49
    %p56 = scmp.eq.s32.totalorder %s18, 1
    %p57 = por %p55, %p56
    %p58 = scmp.ne.s32.totalorder %s49, %s50
    %p59 = scmp.eq.s32.totalorder %s18, 0
    %p60 = por %p58, %p59
    %p61 = scmp.ne.s32.totalorder %s49, %s50
    %p62 = scmp.eq.s32.totalorder %s19, 1
    %p63 = por %p61, %p62
    %p65 = scmp.ne.s32.totalorder %s50, %s64
    %p66 = scmp.eq.s32.totalorder %s19, 0
    %p67 = por %p65, %p66
    %s69 = sadd.s32 %s68, 1
    %p72 = scmp.eq.s32.totalorder %s13, 1
    %p73 = scmp.ne.s32.totalorder %s68, %s70
    %p74 = scmp.eq.s32.totalorder %s13, 0
    %p75 = por %p73, %p74
    %p76 = scmp.ne.s32.totalorder %s68, %s70
    %p77 = scmp.eq.s32.totalorder %s18, 1
    %p78 = por %p76, %p77
    %p79 = scmp.ne.s32.totalorder %s70, %s71
    %p80 = scmp.eq.s32.totalorder %s18, 0
    %p81 = por %p79, %p80
    %p82 = scmp.ne.s32.totalorder %s70, %s71
    %p83 = scmp.eq.s32.totalorder %s19, 1
    %p84 = por %p82, %p83
    %p86 = scmp.ne.s32.totalorder %s71, %s85
    %p87 = scmp.eq.s32.totalorder %s19, 0
    %p88 = por %p86, %p87
    %s90 = sadd.s32 %s89, 1
    %p93 = scmp.eq.s32.totalorder %s13, 1
    %p94 = scmp.ne.s32.totalorder %s89, %s91
    %p95 = scmp.eq.s32.totalorder %s13, 0
    %p96 = por %p94, %p95
    %p97 = scmp.ne.s32.totalorder %s89, %s91
    %p98 = scmp.eq.s32.totalorder %s18, 1
    %p99 = por %p97, %p98
    %p100 = scmp.ne.s32.totalorder %s91, %s92
    %p101 = scmp.eq.s32.totalorder %s18, 0
    %p102 = por %p100, %p101
    %p103 = scmp.ne.s32.totalorder %s91, %s92
    %p104 = scmp.eq.s32.totalorder %s19, 1
    %p105 = por %p103, %p104
    %p107 = scmp.ne.s32.totalorder %s92, %s106
    %p108 = scmp.eq.s32.totalorder %s19, 0
    %p109 = por %p107, %p108
    %s111 = sadd.s32 %s110, 1
    %p114 = scmp.eq.s32.totalorder %s13, 1
    %p115 = scmp.ne.s32.totalorder %s110, %s112
    %p116 = scmp.eq.s32.totalorder %s13, 0
    %p117 = por %p115, %p116
    %p118 = scmp.ne.s32.totalorder %s110, %s112
    %p119 = scmp.eq.s32.totalorder %s18, 1
    %p120 = por %p118, %p119
    %p121 = scmp.ne.s32.totalorder %s112, %s113
    %p122 = scmp.eq.s32.totalorder %s18, 0
    %p123 = por %p121, %p122
    %p124 = scmp.ne.s32.totalorder %s112, %s113
    %p125 = scmp.eq.s32.totalorder %s19, 1
    %p126 = por %p124, %p125
    %p128 = scmp.ne.s32.totalorder %s113, %s127
    %p129 = scmp.eq.s32.totalorder %s19, 0
    %p130 = por %p128, %p129
    %s132 = sadd.s32 %s131, 1
    %p135 = scmp.eq.s32.totalorder %s13, 1
    %p136 = scmp.ne.s32.totalorder %s131, %s133
    %p137 = scmp.eq.s32.totalorder %s13, 0
    %p138 = por %p136, %p137
    %p139 = scmp.ne.s32.totalorder %s131, %s133
    %p140 = scmp.eq.s32.totalorder %s18, 1
    %p141 = por %p139, %p140
    %p142 = scmp.ne.s32.totalorder %s133, %s134
    %p143 = scmp.eq.s32.totalorder %s18, 0
    %p144 = por %p142, %p143
    %p145 = scmp.ne.s32.totalorder %s133, %s134
    %p146 = scmp.eq.s32.totalorder %s19, 1
    %p147 = por %p145, %p146
    %p149 = scmp.ne.s32.totalorder %s134, %s148
    %p150 = scmp.eq.s32.totalorder %s19, 0
    %p151 = por %p149, %p150
    %s153 = sadd.s32 %s152, 1
    %p156 = scmp.eq.s32.totalorder %s13, 1
    %p157 = scmp.ne.s32.totalorder %s152, %s154
    %p158 = scmp.eq.s32.totalorder %s13, 0
    %p159 = por %p157, %p158
    %p160 = scmp.ne.s32.totalorder %s152, %s154
    %p161 = scmp.eq.s32.totalorder %s18, 1
    %p162 = por %p160, %p161
    %p163 = scmp.ne.s32.totalorder %s154, %s155
    %p164 = scmp.eq.s32.totalorder %s18, 0
    %p165 = por %p163, %p164
    %p166 = scmp.ne.s32.totalorder %s154, %s155
    %p167 = scmp.eq.s32.totalorder %s19, 1
    %p168 = por %p166, %p167
    %p170 = scmp.ne.s32.totalorder %s155, %s169
    %p171 = scmp.eq.s32.totalorder %s19, 0
    %p172 = por %p170, %p171
    %s173 = ssub.s32 %s13, %s20
    %p174 = scmp.eq.s32.totalorder %s173, 0
    %s176 = sadd.s32 %s175, 1
    %s177 = scalar_select %p174, %s175, %s176
    %p180 = pneg %p174
    %p181 = scmp.eq.s32.totalorder %s13, 1
    %p182 = por %p180, %p181
    %p183 = scmp.ne.s32.totalorder %s175, %s178
    %p184 = scmp.eq.s32.totalorder %s13, 0
    %p185 = por %p183, %p184
    %p186 = scmp.ne.s32.totalorder %s175, %s178
    %p187 = scmp.eq.s32.totalorder %s18, 1
    %p188 = por %p186, %p187
    %p189 = scmp.ne.s32.totalorder %s178, %s179
    %p190 = scmp.eq.s32.totalorder %s18, 0
    %p191 = por %p189, %p190
    %p192 = scmp.ne.s32.totalorder %s178, %s179
    %p193 = scmp.eq.s32.totalorder %s19, 1
    %p194 = por %p192, %p193
    %p196 = scmp.ne.s32.totalorder %s179, %s195
    %p197 = scmp.eq.s32.totalorder %s19, 0
    %p198 = por %p196, %p197
    %p199 = scmp.le.s32.totalorder 1, %s13
    %p200 = scmp.lt.s32.totalorder %s13, 3
    %p201 = pnand %p199, %p200
    %p202 = pneg %p201
    // Predicated region
    $region9: #{embedded_nn_forward.1} parent=5 // pred_check
      _
    $region10: #{embedded_nn_forward.1} parent=5 // pred_check_branch
      %204 = sbr.rel (%p201) target = $region12
    $region11: #{embedded_nn_forward.1} parent=5 // pred_region
      %s205 = ssub.s32 %s13, 1
      // Predicated region
      $region13: #{embedded_nn_forward.1} parent=11 // pred_check
        %p206 = pneg %p60
      $region14: #{embedded_nn_forward.1} parent=11 // pred_check_branch
        %208 = sbr.rel (%p206) target = $region16
      $region15: #{embedded_nn_forward.1} parent=11 // pred_region
        _
      $region16: #{embedded_nn_forward.1} parent=11 // pred_fallthru
        _
      // Predicated region
      $region17: #{embedded_nn_forward.1} parent=11 // pred_check
        %p209 = pneg %p81
      $region18: #{embedded_nn_forward.1} parent=11 // pred_check_branch
        %211 = sbr.rel (%p209) target = $region20
      $region19: #{embedded_nn_forward.1} parent=11 // pred_region
        _
      $region20: #{embedded_nn_forward.1} parent=11 // pred_fallthru
        _
      // Predicated region
      $region21: #{embedded_nn_forward.1} parent=11 // pred_check
        %p212 = pneg %p102
      $region22: #{embedded_nn_forward.1} parent=11 // pred_check_branch
        %214 = sbr.rel (%p212) target = $region24
      $region23: #{embedded_nn_forward.1} parent=11 // pred_region
        _
      $region24: #{embedded_nn_forward.1} parent=11 // pred_fallthru
        _
      // Predicated region
      $region25: #{embedded_nn_forward.1} parent=11 // pred_check
        %p215 = pneg %p123
      $region26: #{embedded_nn_forward.1} parent=11 // pred_check_branch
        %217 = sbr.rel (%p215) target = $region28
      $region27: #{embedded_nn_forward.1} parent=11 // pred_region
        _
      $region28: #{embedded_nn_forward.1} parent=11 // pred_fallthru
        _
      // Predicated region
      $region29: #{embedded_nn_forward.1} parent=11 // pred_check
        %p218 = pneg %p144
      $region30: #{embedded_nn_forward.1} parent=11 // pred_check_branch
        %220 = sbr.rel (%p218) target = $region32
      $region31: #{embedded_nn_forward.1} parent=11 // pred_region
        _
      $region32: #{embedded_nn_forward.1} parent=11 // pred_fallthru
        _
      // Predicated region
      $region33: #{embedded_nn_forward.1} parent=11 // pred_check
        %p221 = pneg %p165
      $region34: #{embedded_nn_forward.1} parent=11 // pred_check_branch
        %223 = sbr.rel (%p221) target = $region36
      $region35: #{embedded_nn_forward.1} parent=11 // pred_region
        _
      $region36: #{embedded_nn_forward.1} parent=11 // pred_fallthru
        _
    $region12: #{embedded_nn_forward.1} parent=5 // pred_fallthru
      _
    %p224 = scmp.lt.s32.totalorder %s13, 2
    // Predicated region
    $region37: #{embedded_nn_forward.1} parent=5 // pred_check
      %p225 = pneg %p224
    $region38: #{embedded_nn_forward.1} parent=5 // pred_check_branch
      %227 = sbr.rel (%p225) target = $region40
    $region39: #{embedded_nn_forward.1} parent=5 // pred_region
      // Predicated region
      $region41: #{embedded_nn_forward.1} parent=39 // pred_check
        %p228 = pneg %p33
      $region42: #{embedded_nn_forward.1} parent=39 // pred_check_branch
        %230 = sbr.rel (%p228) target = $region44
      $region43: #{embedded_nn_forward.1} parent=39 // pred_region
        %s231 = smul.u32 2, %s13
        %p232 = scmp.lt.s32.totalorder %s231, 3
        %s233 = scalar_select %p232, %s231, 3
        %s234 = smul.addr %s233, 8
        %s235 = scalar_lea.vmem %s0, %s234
        %s236 = smul.u32 2, %s13
      $region44: #{embedded_nn_forward.1} parent=39 // pred_fallthru
        _
    $region40: #{embedded_nn_forward.1} parent=5 // pred_fallthru
      _
    %p237 = scmp.le.s32.totalorder 1, %s13
    %p238 = scmp.lt.s32.totalorder %s13, 3
    %p239 = pnand %p237, %p238
    %p240 = pneg %p239
    // Predicated region
    $region45: #{embedded_nn_forward.1} parent=5 // pred_check
      _
    $region46: #{embedded_nn_forward.1} parent=5 // pred_check_branch
      %242 = sbr.rel (%p239) target = $region48
    $region47: #{embedded_nn_forward.1} parent=5 // pred_region
      %s243 = ssub.s32 %s13, 1
      %s244 = smul.u32 2, %s18
      %p245 = scmp.lt.s32.totalorder %s244, 3
      %s246 = scalar_select %p245, %s244, 3
      %s247 = smul.addr %s246, 8
      %s248 = scalar_lea.vmem %s0, %s247
      %p249 = pneg %p39
      %p250 = pneg %p36
      %p251 = pneg %p60
      %p252 = pneg %p57
      %p253 = pneg %p81
      %p254 = pneg %p78
      %p255 = pneg %p102
      %p256 = pneg %p99
      %p257 = pneg %p123
      %p258 = pneg %p120
      %p259 = pneg %p144
      %p260 = pneg %p141
      %p261 = pneg %p165
      %p262 = pneg %p162
      %p263 = pneg %p191
      %p264 = pneg %p188
      %s265 = smul.u32 2, %s18
      %p266 = scmp.lt.s32.totalorder %s265, 3
      %s267 = scalar_select %p266, %s265, 3
      %s268 = smul.addr %s267, 8
      %s269 = scalar_lea.vmem %s7, %s268
      %s270 = smul.u32 2, %s18
      %p271 = scmp.lt.s32.totalorder %s270, 3
      %s272 = scalar_select %p271, %s270, 3
      %s273 = smul.addr %s272, 8
      %s274 = scalar_lea.vmem %s0, %s273
      %s275 = smul.u32 2, %s18
      %s276 = smul.u32 2, %s18
      %p277 = scmp.lt.s32.totalorder %s276, 3
      %s278 = scalar_select %p277, %s276, 3
      %s279 = smul.addr %s278, 8
      %s280 = scalar_lea.vmem %s7, %s279
      %s281 = smul.u32 2, %s18
      %v283 = vld [vmem:[%s274] sm:$0xff]
      %v284 = vld [vmem:[%s274 + $0x8] sm:$0xff]
      %v285 = vpack.c.bf16 %v284, %v283
      %v286 = vld [vmem:[%s1] sm:$0xf]
      %v287 = vld [vmem:[%s1 + $0x4] sm:$0xf]
      %v288 = vld [vmem:[%s1 + $0x8] sm:$0xf]
      %v289 = vld [vmem:[%s1 + $0xc] sm:$0xf]
      %v290 = vld [vmem:[%s1 + $0x10] sm:$0xf]
      %v291 = vld [vmem:[%s2] sm:$0x1]
      %v293 = vlaneseq
      %v294 = vshrl.u32 %v293, 7
      %v295 = vsub.s32 0, %v294
      %v296 = vrot.slane %v291, %v295
      %v303 = vunpack.c.l.b16 %v286
      %v304 = vunpack.c.l.b16 %v287
      %v305 = vunpack.c.l.b16 %v288
      %v306 = vunpack.c.l.b16 %v289
      %v307 = vunpack.c.l.b16 %v290
      %v308 = vpack.c.b16 %v304, %v303
      %v309 = vpack.c.b16 %v306, %v305
      %v310 = vpack.c.b16 %v307, %v307
      %vm313 = vcmask 326656
      %v315 = vsel %vm313, %v285, 0
      %vm317 = vcmask 1043456
      %v319 = vsel %vm317, %v310, 0
      %321 = vmatprep.subr.bf16.mxu0 0
      %322 = vmatpush1.bf16.msra.mxu0 %v308
      %323 = vmatprep.subr.bf16.mxu0 0
      %324 = vmatpush1.bf16.msra.mxu0 %v309
      %325 = vmatprep.subr.bf16.mxu0 0
      %326 = vmatpush1.bf16.msra.mxu0 %v319
      %327 = vmatprep.subr.bf16.mxu0 0
      %328 = vmatpush1.bf16.msra.mxu0 0
      %329 = vmatprep.subr.bf16.mxu0 0
      %330 = vmatpush1.bf16.msra.mxu0 0
      %331 = vmatprep.subr.bf16.mxu0 0
      %332 = vmatpush1.bf16.msra.mxu0 0
      %333 = vmatprep.subr.bf16.mxu0 0
      %334 = vmatpush1.bf16.msra.mxu0 0
      %335 = vmatprep.subr.bf16.mxu0 0
      %336 = vmatpush1.bf16.msra.mxu0 0
      %337 = vmatprep.subr.bf16.mxu0 0
      %338 = vmatpush1.bf16.msra.mxu0 0
      %339 = vmatprep.subr.bf16.mxu0 0
      %340 = vmatpush1.bf16.msra.mxu0 0
      %341 = vmatprep.subr.bf16.mxu0 0
      %342 = vmatpush1.bf16.msra.mxu0 0
      %343 = vmatprep.subr.bf16.mxu0 0
      %344 = vmatpush1.bf16.msra.mxu0 0
      %345 = vmatprep.subr.bf16.mxu0 0
      %346 = vmatpush1.bf16.msra.mxu0 0
      %347 = vmatprep.subr.bf16.mxu0 0
      %348 = vmatpush1.bf16.msra.mxu0 0
      %349 = vmatprep.subr.bf16.mxu0 0
      %350 = vmatpush1.bf16.msra.mxu0 0
      %351 = vmatprep.subr.bf16.mxu0 0
      %352 = vmatpush1.bf16.msra.mxu0 0
      %353 = vmatprep.mubr.bf16.mxu0 0
      %354 = vmatmul.mubr.bf16.gmra.mrb[0].mxu0 %v315
      %v355 = vpop.f32.mrb[0].mxu0
      %v356 = vadd.f32 %v296, %v355
      %v357 = vpop.f32.mrb[0].mxu0
      %v358 = vpop.f32.mrb[0].mxu0
      %v359 = vadd.f32 %v296, %v358
      %v360 = vpop.f32.mrb[0].mxu0
      %361 = vdwg.mxu0
      %v362 = vmax.f32 %v356, 0.0
      %v363 = vmax.f32 %v359, 0.0
      %v364 = vpack.c.bf16 %v363, %v362
      %v365 = vld [vmem:[%s3] sm:$0xf]
      %v366 = vld [vmem:[%s3 + $0x4] sm:$0xf]
      %v367 = vld [vmem:[%s3 + $0x8] sm:$0xf]
      %v368 = vld [vmem:[%s3 + $0xc] sm:$0xf]
      %v369 = vld [vmem:[%s3 + $0x10] sm:$0xf]
      %v370 = vld [vmem:[%s3 + $0x14] sm:$0xf]
      %v371 = vld [vmem:[%s3 + $0x18] sm:$0xf]
      %v372 = vld [vmem:[%s3 + $0x1c] sm:$0xf]
      %v373 = vld [vmem:[%s3 + $0x20] sm:$0xf]
      %v374 = vld [vmem:[%s3 + $0x24] sm:$0xf]
      %v375 = vld [vmem:[%s4] sm:$0x1]
      %v377 = vlaneseq
      %v378 = vshrl.u32 %v377, 7
      %v379 = vsub.s32 0, %v378
      %v380 = vrot.slane %v375, %v379
      %v392 = vunpack.c.l.b16 %v365
      %v393 = vunpack.c.l.b16 %v366
      %v394 = vunpack.c.l.b16 %v367
      %v395 = vunpack.c.l.b16 %v368
      %v396 = vunpack.c.l.b16 %v369
      %v397 = vunpack.c.l.b16 %v370
      %v398 = vunpack.c.l.b16 %v371
      %v399 = vunpack.c.l.b16 %v372
      %v400 = vunpack.c.l.b16 %v373
      %v401 = vunpack.c.l.b16 %v374
      %v402 = vpack.c.b16 %v393, %v392
      %v403 = vpack.c.b16 %v395, %v394
      %v404 = vpack.c.b16 %v397, %v396
      %v405 = vpack.c.b16 %v399, %v398
      %v406 = vpack.c.b16 %v401, %v400
      %vm412 = vcmask 654336
      %v414 = vsel %vm412, %v364, 0
      %416 = vmatprep.subr.bf16.mxu0 0
      %417 = vmatpush1.bf16.msra.mxu0 %v402
      %418 = vmatprep.subr.bf16.mxu0 0
      %419 = vmatpush1.bf16.msra.mxu0 %v403
      %420 = vmatprep.subr.bf16.mxu0 0
      %421 = vmatpush1.bf16.msra.mxu0 %v404
      %422 = vmatprep.subr.bf16.mxu0 0
      %423 = vmatpush1.bf16.msra.mxu0 %v405
      %424 = vmatprep.subr.bf16.mxu0 0
      %425 = vmatpush1.bf16.msra.mxu0 %v406
      %426 = vmatprep.subr.bf16.mxu0 0
      %427 = vmatpush1.bf16.msra.mxu0 0
      %428 = vmatprep.subr.bf16.mxu0 0
      %429 = vmatpush1.bf16.msra.mxu0 0
      %430 = vmatprep.subr.bf16.mxu0 0
      %431 = vmatpush1.bf16.msra.mxu0 0
      %432 = vmatprep.subr.bf16.mxu0 0
      %433 = vmatpush1.bf16.msra.mxu0 0
      %434 = vmatprep.subr.bf16.mxu0 0
      %435 = vmatpush1.bf16.msra.mxu0 0
      %436 = vmatprep.subr.bf16.mxu0 0
      %437 = vmatpush1.bf16.msra.mxu0 0
      %438 = vmatprep.subr.bf16.mxu0 0
      %439 = vmatpush1.bf16.msra.mxu0 0
      %440 = vmatprep.subr.bf16.mxu0 0
      %441 = vmatpush1.bf16.msra.mxu0 0
      %442 = vmatprep.subr.bf16.mxu0 0
      %443 = vmatpush1.bf16.msra.mxu0 0
      %444 = vmatprep.subr.bf16.mxu0 0
      %445 = vmatpush1.bf16.msra.mxu0 0
      %446 = vmatprep.subr.bf16.mxu0 0
      %447 = vmatpush1.bf16.msra.mxu0 0
      %448 = vmatprep.mubr.bf16.mxu0 0
      %449 = vmatmul.mubr.bf16.gmra.mrb[0].mxu0 %v414
      %v450 = vpop.f32.mrb[0].mxu0
      %v451 = vadd.f32 %v380, %v450
      %v452 = vpop.f32.mrb[0].mxu0
      %v453 = vpop.f32.mrb[0].mxu0
      %v454 = vadd.f32 %v380, %v453
      %v455 = vpop.f32.mrb[0].mxu0
      %456 = vdwg.mxu0
      %v457 = vmax.f32 %v451, 0.0
      %v458 = vmax.f32 %v454, 0.0
      %v459 = vpack.c.bf16 %v458, %v457
      %v460 = vld [vmem:[%s5] sm:$0xf]
      %v461 = vld [vmem:[%s5 + $0x4] sm:$0xf]
      %v462 = vld [vmem:[%s5 + $0x8] sm:$0xf]
      %v463 = vld [vmem:[%s5 + $0xc] sm:$0xf]
      %v464 = vld [vmem:[%s6] sm:$0x1]
      %v466 = vlaneseq
      %v467 = vshrl.u32 %v466, 7
      %v468 = vsub.s32 0, %v467
      %v469 = vrot.slane %v464, %v468
      %v475 = vunpack.c.l.b16 %v460
      %v476 = vunpack.c.l.b16 %v461
      %v477 = vunpack.c.l.b16 %v462
      %v478 = vunpack.c.l.b16 %v463
      %v479 = vpack.c.b16 %v476, %v475
      %v480 = vpack.c.b16 %v478, %v477
      %vm483 = vcmask 261120
      %v485 = vsel %vm483, %v459, 0
      %487 = vmatprep.subr.bf16.mxu0 0
      %488 = vmatpush1.bf16.msra.mxu0 %v479
      %489 = vmatprep.subr.bf16.mxu0 0
      %490 = vmatpush1.bf16.msra.mxu0 %v480
      %491 = vmatprep.subr.bf16.mxu0 0
      %492 = vmatpush1.bf16.msra.mxu0 0
      %493 = vmatprep.subr.bf16.mxu0 0
      %494 = vmatpush1.bf16.msra.mxu0 0
      %495 = vmatprep.subr.bf16.mxu0 0
      %496 = vmatpush1.bf16.msra.mxu0 0
      %497 = vmatprep.subr.bf16.mxu0 0
      %498 = vmatpush1.bf16.msra.mxu0 0
      %499 = vmatprep.subr.bf16.mxu0 0
      %500 = vmatpush1.bf16.msra.mxu0 0
      %501 = vmatprep.subr.bf16.mxu0 0
      %502 = vmatpush1.bf16.msra.mxu0 0
      %503 = vmatprep.subr.bf16.mxu0 0
      %504 = vmatpush1.bf16.msra.mxu0 0
      %505 = vmatprep.subr.bf16.mxu0 0
      %506 = vmatpush1.bf16.msra.mxu0 0
      %507 = vmatprep.subr.bf16.mxu0 0
      %508 = vmatpush1.bf16.msra.mxu0 0
      %509 = vmatprep.subr.bf16.mxu0 0
      %510 = vmatpush1.bf16.msra.mxu0 0
      %511 = vmatprep.subr.bf16.mxu0 0
      %512 = vmatpush1.bf16.msra.mxu0 0
      %513 = vmatprep.subr.bf16.mxu0 0
      %514 = vmatpush1.bf16.msra.mxu0 0
      %515 = vmatprep.subr.bf16.mxu0 0
      %516 = vmatpush1.bf16.msra.mxu0 0
      %517 = vmatprep.subr.bf16.mxu0 0
      %518 = vmatpush1.bf16.msra.mxu0 0
      %519 = vmatprep.mubr.bf16.mxu0 0
      %520 = vmatmul.mubr.bf16.gmra.mrb[0].mxu0 %v485
      %v521 = vpop.f32.mrb[0].mxu0
      %v522 = vadd.f32 %v469, %v521
      %v523 = vpop.f32.mrb[0].mxu0
      %v524 = vpop.f32.mrb[0].mxu0
      %v525 = vadd.f32 %v469, %v524
      %v526 = vpop.f32.mrb[0].mxu0
      %527 = vdwg.mxu0
      %530 = vrot.lane.b32.xlu0 %v522, 127
      %v531 = vpop.permute.xlu0 %530
      %532 = vrot.lane.b32.xlu0 %v525, 127
      %v533 = vpop.permute.xlu0 %532
      %v536 = vmax.f32 %v522, %v531
      %v537 = vmax.f32 %v525, %v533
      %v538 = vsub.f32 %v522, %v536
      %v539 = vsub.f32 %v525, %v537
      %v540 = vmul.f32 %v538, 1.442695
      %v541 = vpow.pop %v540
      %v542 = vmul.f32 %v539, 1.442695
      %v543 = vpow.pop %v542
      %546 = vrot.lane.b32.xlu0 %v536, 1
      %v547 = vpop.permute.xlu0 %546
      %548 = vrot.lane.b32.xlu0 %v537, 1
      %v549 = vpop.permute.xlu0 %548
      %v552 = vsub.f32 %v522, %v547
      %v553 = vsub.f32 %v525, %v549
      %v554 = vmul.f32 %v552, 1.442695
      %v555 = vpow.pop %v554
      %v556 = vmul.f32 %v553, 1.442695
      %v557 = vpow.pop %v556
      %560 = vrot.lane.b32.xlu0 %v555, 127
      %v561 = vpop.permute.xlu0 %560
      %562 = vrot.lane.b32.xlu0 %v557, 127
      %v563 = vpop.permute.xlu0 %562
      %v566 = vadd.f32 %v541, %v561
      %v567 = vadd.f32 %v543, %v563
      %v568 = vlog2.pop %v566
      %v569 = vmul.f32 %v568, 0.6931472
      %v570 = vlog2.pop %v567
      %v571 = vmul.f32 %v570, 0.6931472
      %v572 = vadd.f32 %v536, %v569
      %v573 = vadd.f32 %v537, %v571
      %575 = vset.pattern.permute.xlu0 0
      %576 = vperm.xlu0 %575, %v572
      %v577 = vpop.permute.xlu0 %576
      %580 = vset.pattern.permute.xlu0 0
      %581 = vperm.xlu0 %580, %v573
      %v582 = vpop.permute.xlu0 %581
      %v584 = vsub.f32 %v522, %v577
      %v585 = vsub.f32 %v525, %v582
      %vm586 = vcmask 15360
      %587 = vst.msk [vmem:[%s280] sm:$0xff] %vm586, %v584
      %588 = vst.msk [vmem:[%s280 + $0x8] sm:$0xff] %vm586, %v585
      %s589 = smul.u32 2, %s18
      %p590 = scmp.lt.s32.totalorder %s589, 3
      %s591 = scalar_select %p590, %s589, 3
      %s592 = smul.addr %s591, 8
      %s593 = scalar_lea.vmem %s7, %s592
      // Predicated region
      $region49: #{embedded_nn_forward.1} parent=47 // pred_check
        %p594 = pneg %p188
      $region50: #{embedded_nn_forward.1} parent=47 // pred_check_branch
        %596 = sbr.rel (%p594) target = $region52
      $region51: #{embedded_nn_forward.1} parent=47 // pred_region
        %s597 = smul.u32 2, %s18
      $region52: #{embedded_nn_forward.1} parent=47 // pred_fallthru
        _
    $region48: #{embedded_nn_forward.1} parent=5 // pred_fallthru
      _
    %p598 = scmp.le.s32.totalorder 2, %s13
    // Predicated region
    $region53: #{embedded_nn_forward.1} parent=5 // pred_check
      %p599 = pneg %p598
    $region54: #{embedded_nn_forward.1} parent=5 // pred_check_branch
      %601 = sbr.rel (%p599) target = $region56
    $region55: #{embedded_nn_forward.1} parent=5 // pred_region
      %s602 = ssub.s32 %s13, 2
      // Predicated region
      $region57: #{embedded_nn_forward.1} parent=55 // pred_check
        %p603 = pneg %p194
      $region58: #{embedded_nn_forward.1} parent=55 // pred_check_branch
        %605 = sbr.rel (%p603) target = $region60
      $region59: #{embedded_nn_forward.1} parent=55 // pred_region
        %s606 = smul.u32 2, %s19
        %p607 = scmp.lt.s32.totalorder %s606, 3
        %s608 = scalar_select %p607, %s606, 3
        %s609 = smul.addr %s608, 8
        %s610 = scalar_lea.vmem %s7, %s609
      $region60: #{embedded_nn_forward.1} parent=55 // pred_fallthru
        _
    $region56: #{embedded_nn_forward.1} parent=5 // pred_fallthru
      _
  $region6: #{embedded_nn_forward.1} parent=0 // loop_footer
    %s17 = sadd.s32 1, %s13
  $region7: #{embedded_nn_forward.1} parent=0 // loop_footer_branch
    %12 = sbr.rel target = $region3
  $region8: #{embedded_nn_forward.1} parent=0 // loop_exit
    _

</llo_original>
